<compile_context>
chip_gen: v5e
topology: v5e:2x2
jax: 0.10.0
libtpu: 0.0.40
codegen_flags: <defaults>
</compile_context>

<pallas_src>
import jax
import jax.numpy as jnp
from jax.experimental import pallas as pl
from jax.experimental.pallas import tpu as pltpu

HIDDEN_LAYER_SIZE = 128
NUM_MODULATION_TYPES = 3
N_FEATURES = 16
OUT_PAD = 128  # lane-dense padded logits width (>= NUM_MODULATION_TYPES)


def _round_up(x, m):
    return ((x + m - 1) // m) * m


def _mlp_kernel(x_ref, w1_ref, b1_ref, w2_ref, b2_ref, o_ref):
    # fc1: (TB, 16) bf16 @ (16, 128) bf16 -> f32 accumulation on the MXU.
    h = jnp.dot(x_ref[...], w1_ref[...], preferred_element_type=jnp.float32)
    # Bias + ReLU in f32 on the VPU.
    h = jnp.maximum(h + b1_ref[...], 0.0)
    # fc2: (TB, 128) bf16 @ (128, 128-padded) bf16 -> f32.
    y = jnp.dot(h.astype(jnp.bfloat16), w2_ref[...],
                preferred_element_type=jnp.float32)
    o_ref[...] = (y + b2_ref[...]).astype(o_ref.dtype)


def signal_classifier_forward(x, w1, b1, w2, b2, *, tb=2048):
    """Pallas forward of SignalClassifierModel.

    x:  (B, N_FEATURES) float32
    w1: (N_FEATURES, HIDDEN_LAYER_SIZE)   (transpose of PyTorch (out, in))
    b1: (HIDDEN_LAYER_SIZE,)
    w2: (HIDDEN_LAYER_SIZE, NUM_MODULATION_TYPES)
    b2: (NUM_MODULATION_TYPES,)
    returns (B, NUM_MODULATION_TYPES) float32 logits.
    """
    B = x.shape[0]
    # Batch tile: multiple of 8 sublanes; shrink for tiny batches.
    tb_eff = min(tb, _round_up(B, 8))
    B_pad = _round_up(B, tb_eff)
    grid = (B_pad // tb_eff,)

    # bf16 inputs/weights (MXU-native), f32 biases.
    x_bf16 = x.astype(jnp.bfloat16)
    if B_pad != B:
        x_bf16 = jnp.pad(x_bf16, ((0, B_pad - B), (0, 0)))
    w1_bf16 = w1.astype(jnp.bfloat16)
    b1_2d = b1.reshape(1, HIDDEN_LAYER_SIZE).astype(jnp.float32)

    # Zero-pad fc2 to a lane-dense 128-wide output.
    w2_pad = jnp.zeros((HIDDEN_LAYER_SIZE, OUT_PAD), jnp.bfloat16)
    w2_pad = w2_pad.at[:, :NUM_MODULATION_TYPES].set(w2.astype(jnp.bfloat16))
    b2_pad = jnp.zeros((1, OUT_PAD), jnp.float32)
    b2_pad = b2_pad.at[:, :NUM_MODULATION_TYPES].set(b2.astype(jnp.float32))

    weight_bytes = (w1_bf16.size * 2 + w2_pad.size * 2
                    + b1_2d.size * 4 + b2_pad.size * 4)
    cost = pl.CostEstimate(
        flops=2 * B_pad * (N_FEATURES * HIDDEN_LAYER_SIZE
                           + HIDDEN_LAYER_SIZE * OUT_PAD),
        transcendentals=0,
        bytes_accessed=B_pad * (N_FEATURES * 2 + OUT_PAD * 4) + weight_bytes,
    )

    out_pad = pl.pallas_call(
        _mlp_kernel,
        out_shape=jax.ShapeDtypeStruct((B_pad, OUT_PAD), jnp.float32),
        grid=grid,
        in_specs=[
            # x: one batch tile per grid step (pipelined).
            pl.BlockSpec((tb_eff, N_FEATURES), lambda i: (i, 0)),
            # Weights / biases: constant index_map -> resident in VMEM.
            pl.BlockSpec((N_FEATURES, HIDDEN_LAYER_SIZE), lambda i: (0, 0)),
            pl.BlockSpec((1, HIDDEN_LAYER_SIZE), lambda i: (0, 0)),
            pl.BlockSpec((HIDDEN_LAYER_SIZE, OUT_PAD), lambda i: (0, 0)),
            pl.BlockSpec((1, OUT_PAD), lambda i: (0, 0)),
        ],
        out_specs=pl.BlockSpec((tb_eff, OUT_PAD), lambda i: (i, 0)),
        compiler_params=pltpu.CompilerParams(
            dimension_semantics=("parallel",),
            vmem_limit_bytes=32 * 1024 * 1024,
        ),
        cost_estimate=cost,
    )(x_bf16, w1_bf16, b1_2d, w2_pad, b2_pad)

    # Strip batch padding and the lane padding of the logits.
    return out_pad[:B, :NUM_MODULATION_TYPES]


def init_params(key):
    """Deterministic init mimicking PyTorch nn.Linear default U[-1/sqrt(fan_in), +1/sqrt(fan_in)]."""
    k1, k2, k3, k4 = jax.random.split(key, 4)
    bound1 = 1.0 / jnp.sqrt(jnp.float32(N_FEATURES))
    bound2 = 1.0 / jnp.sqrt(jnp.float32(HIDDEN_LAYER_SIZE))
    w1 = jax.random.uniform(
        k1, (N_FEATURES, HIDDEN_LAYER_SIZE), jnp.float32, -bound1, bound1)
    b1 = jax.random.uniform(
        k2, (HIDDEN_LAYER_SIZE,), jnp.float32, -bound1, bound1)
    w2 = jax.random.uniform(
        k3, (HIDDEN_LAYER_SIZE, NUM_MODULATION_TYPES), jnp.float32, -bound2, bound2)
    b2 = jax.random.uniform(
        k4, (NUM_MODULATION_TYPES,), jnp.float32, -bound2, bound2)
    return w1, b1, w2, b2


def _reference(x, w1, b1, w2, b2):
    # Reference with the same bf16 operand casts / f32 accumulation as the kernel.
    xb = x.astype(jnp.bfloat16)
    w1b = w1.astype(jnp.bfloat16)
    w2b = w2.astype(jnp.bfloat16)
    h = jnp.maximum(
        jnp.dot(xb, w1b, preferred_element_type=jnp.float32) + b1, 0.0)
    return jnp.dot(h.astype(jnp.bfloat16), w2b,
                   preferred_element_type=jnp.float32) + b2


if __name__ == "__main__":
    key = jax.random.PRNGKey(0)
    kx, kp, kx2 = jax.random.split(key, 3)
    w1, b1, w2, b2 = init_params(kp)

    # Small batch (single grid step).
    B = 8
    x = jax.random.normal(kx, (B, N_FEATURES), jnp.float32)
    logits = signal_classifier_forward(x, w1, b1, w2, b2)
    jax.block_until_ready(logits)
    assert logits.shape == (B, NUM_MODULATION_TYPES)
    ref = _reference(x, w1, b1, w2, b2)
    assert jnp.allclose(logits, ref, atol=1e-2, rtol=1e-2)
    # Loose check against full-f32 math (bf16 rounding tolerance).
    ref_f32 = jnp.maximum(x @ w1 + b1, 0.0) @ w2 + b2
    assert jnp.allclose(logits, ref_f32, atol=5e-2, rtol=5e-2)

    # Batch that exercises multiple grid steps + wrapper-side batch padding.
    B2 = 300
    x2 = jax.random.normal(kx2, (B2, N_FEATURES), jnp.float32)
    logits2 = signal_classifier_forward(x2, w1, b1, w2, b2, tb=128)
    jax.block_until_ready(logits2)
    assert logits2.shape == (B2, NUM_MODULATION_TYPES)
    ref2 = _reference(x2, w1, b1, w2, b2)
    assert jnp.allclose(logits2, ref2, atol=1e-2, rtol=1e-2)

    print("KERNEL_OK")
</pallas_src>

<mosaic_0001>
module attributes {stable_mosaic.version = 11 : i64} {
  func.func @_mlp_kernel(%arg0: i32, %arg1: memref<8x16xbf16, #tpu.memory_space<vmem>>, %arg2: memref<16x128xbf16, #tpu.memory_space<vmem>>, %arg3: memref<1x128xf32, #tpu.memory_space<vmem>>, %arg4: memref<128x128xbf16, #tpu.memory_space<vmem>>, %arg5: memref<1x128xf32, #tpu.memory_space<vmem>>, %arg6: memref<8x128xf32, #tpu.memory_space<vmem>>) attributes {dimension_semantics = [#tpu.dimension_semantics<parallel>], iteration_bounds = array<i64: 1>, scalar_prefetch = 0 : i64, scratch_operands = 0 : i64, tpu.core_type = #tpu.core_type<tc>, window_params = [{transform_indices = @transform_0, window_bounds = array<i64: 8, 16>}, {pipeline_mode = #tpu.pipeline_mode<synchronous>, transform_indices = @transform_1, window_bounds = array<i64: 16, 128>}, {pipeline_mode = #tpu.pipeline_mode<synchronous>, transform_indices = @transform_2, window_bounds = array<i64: 1, 128>}, {pipeline_mode = #tpu.pipeline_mode<synchronous>, transform_indices = @transform_3, window_bounds = array<i64: 128, 128>}, {pipeline_mode = #tpu.pipeline_mode<synchronous>, transform_indices = @transform_4, window_bounds = array<i64: 1, 128>}, {transform_indices = @transform_5, window_bounds = array<i64: 8, 128>}]} {
    %c0 = arith.constant 0 : index
    %c0_0 = arith.constant 0 : index
    %0 = vector.load %arg1[%c0, %c0_0] : memref<8x16xbf16, #tpu.memory_space<vmem>>, vector<8x16xbf16>
    %c0_1 = arith.constant 0 : index
    %c0_2 = arith.constant 0 : index
    %1 = vector.load %arg2[%c0_1, %c0_2] : memref<16x128xbf16, #tpu.memory_space<vmem>>, vector<16x128xbf16>
    %cst = arith.constant dense<0.000000e+00> : vector<8x128xf32>
    %2 = tpu.matmul %0, %1, %cst {dimension_numbers = #tpu.dot_dimension_numbers<[1], [0], [0], [1], [0, 0, 1, 1], [], []>} : vector<8x16xbf16>, vector<16x128xbf16>, vector<8x128xf32> -> vector<8x128xf32>
    %c0_3 = arith.constant 0 : index
    %c0_4 = arith.constant 0 : index
    %3 = vector.load %arg3[%c0_3, %c0_4] : memref<1x128xf32, #tpu.memory_space<vmem>>, vector<1x128xf32>
    %4 = vector.broadcast %3 : vector<1x128xf32> to vector<8x128xf32>
    %5 = arith.addf %2, %4 : vector<8x128xf32>
    %cst_5 = arith.constant 0.000000e+00 : f32
    %6 = vector.broadcast %cst_5 : f32 to vector<8x128xf32>
    %7 = arith.maximumf %5, %6 : vector<8x128xf32>
    %8 = arith.truncf %7 : vector<8x128xf32> to vector<8x128xbf16>
    %c0_6 = arith.constant 0 : index
    %c0_7 = arith.constant 0 : index
    %9 = vector.load %arg4[%c0_6, %c0_7] : memref<128x128xbf16, #tpu.memory_space<vmem>>, vector<128x128xbf16>
    %cst_8 = arith.constant dense<0.000000e+00> : vector<8x128xf32>
    %10 = tpu.matmul %8, %9, %cst_8 {dimension_numbers = #tpu.dot_dimension_numbers<[1], [0], [0], [1], [0, 0, 1, 1], [], []>} : vector<8x128xbf16>, vector<128x128xbf16>, vector<8x128xf32> -> vector<8x128xf32>
    %c0_9 = arith.constant 0 : index
    %c0_10 = arith.constant 0 : index
    %11 = vector.load %arg5[%c0_9, %c0_10] : memref<1x128xf32, #tpu.memory_space<vmem>>, vector<1x128xf32>
    %12 = vector.broadcast %11 : vector<1x128xf32> to vector<8x128xf32>
    %13 = arith.addf %10, %12 : vector<8x128xf32>
    %c0_11 = arith.constant 0 : index
    %c0_12 = arith.constant 0 : index
    %14 = vector.load %arg6[%c0_11, %c0_12] : memref<8x128xf32, #tpu.memory_space<vmem>>, vector<8x128xf32>
    tpu.vector_store %arg6[%c0_11, %c0_12], %13 {strides = array<i32>} : memref<8x128xf32, #tpu.memory_space<vmem>>, vector<8x128xf32>,
    return
  }
  func.func @transform_0(%arg0: i32) -> (i32, i32) {
    %c0_i32 = arith.constant 0 : i32
    %c0_i32_0 = arith.constant 0 : i32
    return %arg0, %c0_i32 : i32, i32
  }
  func.func @transform_1(%arg0: i32) -> (i32, i32) {
    %c0_i32 = arith.constant 0 : i32
    %c0_i32_0 = arith.constant 0 : i32
    %c0_i32_1 = arith.constant 0 : i32
    return %c0_i32, %c0_i32_0 : i32, i32
  }
  func.func @transform_2(%arg0: i32) -> (i32, i32) {
    %c0_i32 = arith.constant 0 : i32
    %c0_i32_0 = arith.constant 0 : i32
    %c0_i32_1 = arith.constant 0 : i32
    return %c0_i32, %c0_i32_0 : i32, i32
  }
  func.func @transform_3(%arg0: i32) -> (i32, i32) {
    %c0_i32 = arith.constant 0 : i32
    %c0_i32_0 = arith.constant 0 : i32
    %c0_i32_1 = arith.constant 0 : i32
    return %c0_i32, %c0_i32_0 : i32, i32
  }
  func.func @transform_4(%arg0: i32) -> (i32, i32) {
    %c0_i32 = arith.constant 0 : i32
    %c0_i32_0 = arith.constant 0 : i32
    %c0_i32_1 = arith.constant 0 : i32
    return %c0_i32, %c0_i32_0 : i32, i32
  }
  func.func @transform_5(%arg0: i32) -> (i32, i32) {
    %c0_i32 = arith.constant 0 : i32
    %c0_i32_0 = arith.constant 0 : i32
    return %arg0, %c0_i32 : i32, i32
  }
}

</mosaic_0001>

<llo_original>
// kernel: tpu_custom_call.1
$region0: #{tpu_custom_call.1}
  #allocation0 [shape = 'u32[]', space=smem, size = 0x4, offset = 0x4, fixed_abs, tag = 'smem constant byte address 0x4 - core index']
  #allocation1 [shape = 'u32[72,128]{1,0:T(1,128)}', space=vmem, size = 0x9000, scoped, tag = 'internal scratch']
  %s0 = inlined_call_operand.hbm [shape: bf16[8,16], index: 0, kind: input, shape index: {}]
  %s1 = inlined_call_operand.hbm [shape: bf16[16,128], index: 1, kind: input, shape index: {}]
  %s2 = inlined_call_operand.vmem [shape: f32[1,128], index: 2, kind: input, shape index: {}]
  %s3 = inlined_call_operand.hbm [shape: bf16[128,128], index: 3, kind: input, shape index: {}]
  %s4 = inlined_call_operand.vmem [shape: f32[1,128], index: 4, kind: input, shape index: {}]
  %s5 = inlined_call_operand.hbm [shape: f32[8,128], index: 5, kind: output, shape index: {}]
  %s6 = sld [smem:[#allocation0]]
  $region42: #{tpu_custom_call.1} parent=0
    _
  %s8 = ssub.s32 1, %s6
  %s9 = scalar_select 0, %s8, %s6
  $region1: #{tpu_custom_call.1} parent=0
    #allocation2 [shape = 'u8[2048]{0}', space=vmem, size = 0x800, scoped, tag = 'input window, operand 0, single buffered']
    #allocation3 [shape = 's32[1]{0}', space=sflag, size = 0x4, scoped, tag = 'scoped memory for tpu_custom_call.1']
    #allocation4 [shape = 's32[1]{0}', space=sflag, size = 0x4, scoped, tag = 'scoped memory for tpu_custom_call.1']
    #allocation5 [shape = 'u8[4096]{0}', space=vmem, size = 0x1000, scoped, tag = 'input window, operand 1, single buffered']
    #allocation6 [shape = 's32[1]{0}', space=sflag, size = 0x4, scoped, tag = 'scoped memory for tpu_custom_call.1']
    #allocation7 [shape = 'u8[32768]{0}', space=vmem, size = 0x8000, scoped, tag = 'input window, operand 3, single buffered']
    #allocation8 [shape = 'u8[4096]{0}', space=vmem, size = 0x1000, scoped, tag = 'output window, operand 0, single buffered']
    %10 = vsyncpa [#allocation3], 0
    %11 = vsyncpa [#allocation6], 0
    %12 = vsyncpa [#allocation4], 0
    // Predicated region
    $region2: #{tpu_custom_call.1} parent=1 // pred_check
      _
    $region3: #{tpu_custom_call.1} parent=1 // pred_check_branch
      %14 = sbr.rel (0) target = $region5
    $region4: #{tpu_custom_call.1} parent=1 // pred_region
      %16 = vsyncadd [#allocation3], 0
      %s18 = sshll.u32 %s0, 4
      %s19 = int_to_ptr.hbm [resolvable:$true] %s18
      %s20 = sshll.u32 [#allocation2], 4
      %s21 = int_to_ptr.vmem [resolvable:$true] %s20
      %23 = dma.hbm_to_vmem [thread:$0]  %s19, 64, %s21, [#allocation3]
    $region5: #{tpu_custom_call.1} parent=1 // pred_fallthru
      _
    // Predicated region
    $region6: #{tpu_custom_call.1} parent=1 // pred_check
      _
    $region7: #{tpu_custom_call.1} parent=1 // pred_check_branch
      %25 = sbr.rel (0) target = $region9
    $region8: #{tpu_custom_call.1} parent=1 // pred_region
      %27 = vsyncadd [#allocation6], 0
      %s28 = sshll.u32 %s1, 4
      %s29 = int_to_ptr.hbm [resolvable:$true] %s28
      %s30 = sshll.u32 [#allocation5], 4
      %s31 = int_to_ptr.vmem [resolvable:$true] %s30
      %36 = dma.hbm_to_vmem [thread:$0]  %s29, 128, %s31, [#allocation6], 64, 64, 4
    $region9: #{tpu_custom_call.1} parent=1 // pred_fallthru
      _
    // Predicated region
    $region10: #{tpu_custom_call.1} parent=1 // pred_check
      _
    $region11: #{tpu_custom_call.1} parent=1 // pred_check_branch
      %38 = sbr.rel (0) target = $region13
    $region12: #{tpu_custom_call.1} parent=1 // pred_region
      _
    $region13: #{tpu_custom_call.1} parent=1 // pred_fallthru
      _
    // Predicated region
    $region14: #{tpu_custom_call.1} parent=1 // pred_check
      _
    $region15: #{tpu_custom_call.1} parent=1 // pred_check_branch
      %40 = sbr.rel (0) target = $region17
    $region16: #{tpu_custom_call.1} parent=1 // pred_region
      %42 = vsyncadd [#allocation6], 0
      %s43 = sshll.u32 %s3, 4
      %s44 = int_to_ptr.hbm [resolvable:$true] %s43
      %s45 = sshll.u32 [#allocation7], 4
      %s46 = int_to_ptr.vmem [resolvable:$true] %s45
      %51 = dma.hbm_to_vmem [thread:$0]  %s44, 1024, %s46, [#allocation6], 64, 64, 4
    $region17: #{tpu_custom_call.1} parent=1 // pred_fallthru
      _
    // Predicated region
    $region18: #{tpu_custom_call.1} parent=1 // pred_check
      _
    $region19: #{tpu_custom_call.1} parent=1 // pred_check_branch
      %53 = sbr.rel (0) target = $region21
    $region20: #{tpu_custom_call.1} parent=1 // pred_region
      _
    $region21: #{tpu_custom_call.1} parent=1 // pred_fallthru
      _
    // Predicated region
    $region22: #{tpu_custom_call.1} parent=1 // pred_check
      _
    $region23: #{tpu_custom_call.1} parent=1 // pred_check_branch
      %55 = sbr.rel (0) target = $region25
    $region24: #{tpu_custom_call.1} parent=1 // pred_region
      %57 = dma.done [#allocation3], 64
    $region25: #{tpu_custom_call.1} parent=1 // pred_fallthru
      _
    // Predicated region
    $region26: #{tpu_custom_call.1} parent=1 // pred_check
      _
    $region27: #{tpu_custom_call.1} parent=1 // pred_check_branch
      %59 = sbr.rel (0) target = $region29
    $region28: #{tpu_custom_call.1} parent=1 // pred_region
      %61 = dma.done [#allocation6], 128
    $region29: #{tpu_custom_call.1} parent=1 // pred_fallthru
      _
    // Predicated region
    $region30: #{tpu_custom_call.1} parent=1 // pred_check
      _
    $region31: #{tpu_custom_call.1} parent=1 // pred_check_branch
      %63 = sbr.rel (0) target = $region33
    $region32: #{tpu_custom_call.1} parent=1 // pred_region
      %65 = dma.done [#allocation6], 1024
    $region33: #{tpu_custom_call.1} parent=1 // pred_fallthru
      _
    %v67 = vld [vmem:[#allocation2] sm:$0xf]
    %v68 = vld [vmem:[#allocation5] sm:$0xf]
    %v69 = vld [vmem:[#allocation5 + $0x4] sm:$0xf]
    %v70 = vld [vmem:[%s2] sm:$0x1]
    %v72 = vperm.slane %v70, 0
    %v76 = vunpack.c.l.b16 %v68
    %v77 = vunpack.c.l.b16 %v69
    %v78 = vpack.c.b16 %v77, %v76
    %vm80 = vcmask 130048
    %v82 = vsel %vm80, %v67, 0
    %84 = vmatpush.bf16.msra.mxu0 0
    %85 = vmatpush.bf16.msra.mxu0 0
    %86 = vmatpush.bf16.msra.mxu0 0
    %87 = vmatpush.bf16.msra.mxu0 0
    %88 = vmatpush.bf16.msra.mxu0 0
    %89 = vmatpush.bf16.msra.mxu0 0
    %90 = vmatpush.bf16.msra.mxu0 0
    %91 = vmatpush.bf16.msra.mxu0 %v78
    %92 = vmatmul.bf16.gmra.mxu0 %v82
    %v93 = vpop.f32.mrf.mxu0
    %v94 = vadd.f32 %v72, %v93
    %v95 = vpop.f32.mrf.mxu0
    %96 = vdwg.mxu0
    %v97 = vmax.f32 %v94, 0.0
    %v98 = vpack.c.bf16 %v97, %v97
    %v99 = vld [vmem:[#allocation7] sm:$0xf]
    %v100 = vld [vmem:[#allocation7 + $0x4] sm:$0xf]
    %v101 = vld [vmem:[#allocation7 + $0x8] sm:$0xf]
    %v102 = vld [vmem:[#allocation7 + $0xc] sm:$0xf]
    %v103 = vld [vmem:[#allocation7 + $0x10] sm:$0xf]
    %v104 = vld [vmem:[#allocation7 + $0x14] sm:$0xf]
    %v105 = vld [vmem:[#allocation7 + $0x18] sm:$0xf]
    %v106 = vld [vmem:[#allocation7 + $0x1c] sm:$0xf]
    %v107 = vld [vmem:[#allocation7 + $0x20] sm:$0xf]
    %v108 = vld [vmem:[#allocation7 + $0x24] sm:$0xf]
    %v109 = vld [vmem:[#allocation7 + $0x28] sm:$0xf]
    %v110 = vld [vmem:[#allocation7 + $0x2c] sm:$0xf]
    %v111 = vld [vmem:[#allocation7 + $0x30] sm:$0xf]
    %v112 = vld [vmem:[#allocation7 + $0x34] sm:$0xf]
    %v113 = vld [vmem:[#allocation7 + $0x38] sm:$0xf]
    %v114 = vld [vmem:[#allocation7 + $0x3c] sm:$0xf]
    %v115 = vld [vmem:[%s4] sm:$0x1]
    %v117 = vperm.slane %v115, 0
    %v135 = vunpack.c.l.b16 %v99
    %v136 = vunpack.c.l.b16 %v100
    %v137 = vunpack.c.l.b16 %v101
    %v138 = vunpack.c.l.b16 %v102
    %v139 = vunpack.c.l.b16 %v103
    %v140 = vunpack.c.l.b16 %v104
    %v141 = vunpack.c.l.b16 %v105
    %v142 = vunpack.c.l.b16 %v106
    %v143 = vunpack.c.l.b16 %v107
    %v144 = vunpack.c.l.b16 %v108
    %v145 = vunpack.c.l.b16 %v109
    %v146 = vunpack.c.l.b16 %v110
    %v147 = vunpack.c.l.b16 %v111
    %v148 = vunpack.c.l.b16 %v112
    %v149 = vunpack.c.l.b16 %v113
    %v150 = vunpack.c.l.b16 %v114
    %v151 = vpack.c.b16 %v136, %v135
    %v152 = vpack.c.b16 %v138, %v137
    %v153 = vpack.c.b16 %v140, %v139
    %v154 = vpack.c.b16 %v142, %v141
    %v155 = vpack.c.b16 %v144, %v143
    %v156 = vpack.c.b16 %v146, %v145
    %v157 = vpack.c.b16 %v148, %v147
    %v158 = vpack.c.b16 %v150, %v149
    %167 = vmatpush.bf16.msra.mxu0 %v158
    %168 = vmatpush.bf16.msra.mxu0 %v157
    %169 = vmatpush.bf16.msra.mxu0 %v156
    %170 = vmatpush.bf16.msra.mxu0 %v155
    %171 = vmatpush.bf16.msra.mxu0 %v154
    %172 = vmatpush.bf16.msra.mxu0 %v153
    %173 = vmatpush.bf16.msra.mxu0 %v152
    %174 = vmatpush.bf16.msra.mxu0 %v151
    %175 = vmatmul.bf16.gmra.mxu0 %v98
    %v176 = vpop.f32.mrf.mxu0
    %v177 = vadd.f32 %v117, %v176
    %v178 = vpop.f32.mrf.mxu0
    %179 = vdwg.mxu0
    %180 = vst [vmem:[#allocation8] sm:$0xff] %v177
    // Predicated region
    $region34: #{tpu_custom_call.1} parent=1 // pred_check
      _
    $region35: #{tpu_custom_call.1} parent=1 // pred_check_branch
      %182 = sbr.rel (0) target = $region37
    $region36: #{tpu_custom_call.1} parent=1 // pred_region
      %184 = vsyncadd [#allocation4], 0
      %s186 = sshll.u32 [#allocation8], 4
      %s187 = int_to_ptr.vmem [resolvable:$true] %s186
      %s188 = sshll.u32 %s5, 4
      %s189 = int_to_ptr.hbm [resolvable:$true] %s188
      %191 = dma.vmem_to_hbm [thread:$0]  %s187, 128, %s189, [#allocation4]
    $region37: #{tpu_custom_call.1} parent=1 // pred_fallthru
      _
    // Predicated region
    $region38: #{tpu_custom_call.1} parent=1 // pred_check
      _
    $region39: #{tpu_custom_call.1} parent=1 // pred_check_branch
      %193 = sbr.rel (0) target = $region41
    $region40: #{tpu_custom_call.1} parent=1 // pred_region
      %195 = dma.done [#allocation4], 128
    $region41: #{tpu_custom_call.1} parent=1 // pred_fallthru
      _
    %196 = vsyncpa [#allocation3], 1
    %197 = vsyncpa [#allocation6], 1
    %198 = vsyncpa [#allocation4], 1

</llo_original>
